<compile_context>
chip_gen: v6e
topology: v6e:2x2x1
jax: 0.10.0
libtpu: 0.0.40
codegen_flags: <defaults>
</compile_context>

<pallas_src>
import functools

import jax
import jax.numpy as jnp
from jax import lax
from jax.experimental import pallas as pl
from jax.experimental.pallas import tpu as pltpu


def _round_up(x, m):
    return (x + m - 1) // m * m


def _maxout_conv_kernel(w_ref, p_ref, out_ref, *, k_groups, cpad, pool_win):
    """Per (batch, Hp*Wp-tile) grid step.

    w_ref   : (k_groups*cpad, K_pad)   bf16  reordered conv weights + bias column
    p_ref   : (pool_win, K_pad, tile)  bf16  im2col patches for this spatial tile
    out_ref : (cpad, tile)             f32   pooled maxout output (lane-dense)
    """
    acc = None
    # pool_win is small & static (pool_size**2).  Each matmul already has a
    # lane-dense RHS (tile >= 128 columns) and a 128-ish contraction, so the MXU
    # stays fed; folding the pool_win matmuls into one would require an
    # in-kernel relayout of the RHS, so we keep the short unrolled loop.
    for w in range(pool_win):
        z = jnp.dot(w_ref[...], p_ref[w],
                    preferred_element_type=jnp.float32)   # (k_groups*cpad, tile)
        # Maxout over k_groups: 8-aligned sublane row blocks (cheap VPU max, f32).
        m = z[0:cpad, :]
        for g in range(1, k_groups):
            m = jnp.maximum(m, z[g * cpad:(g + 1) * cpad, :])
        # Spatial max pooling: max over pooling-window offsets.
        acc = m if acc is None else jnp.maximum(acc, m)
    out_ref[...] = acc


def maxout_conv2d(x, weight, bias, *, k_groups, kernel_size, padding, stride,
                  pool_size, pool_stride, compute_dtype=jnp.bfloat16):
    N, Cin, H, W = x.shape
    Ctot = weight.shape[0]
    Cout = Ctot // k_groups
    KH = KW = kernel_size
    Hc = (H + 2 * padding - KH) // stride + 1
    Wc = (W + 2 * padding - KW) // stride + 1
    Hp = (Hc - pool_size) // pool_stride + 1
    Wp = (Wc - pool_size) // pool_stride + 1
    pool_win = pool_size * pool_size
    K = Cin * KH * KW
    hw = Hp * Wp

    # ---------------- padded / aligned sizes ----------------
    cpad = _round_up(Cout, 8)              # per-group sublane padding (f32 acc)
    ctot_pad = k_groups * cpad
    k_pad = _round_up(K + 1, 16)           # +1 = ones row for the fused bias

    # Hp*Wp tile from a VMEM budget: double-buffered patch stream
    # (2 * pool_win * k_pad * tile * 2B) must stay well under the scoped VMEM
    # limit on every generation (v7x has 64 MiB physical / 32 MiB scoped).
    itemsize = jnp.dtype(compute_dtype).itemsize
    col_bytes = pool_win * k_pad * itemsize
    budget = 8 * 1024 * 1024               # per input buffer (x2 double buffer)
    tile = max(128, min(2048, (budget // col_bytes) // 128 * 128))
    tile = min(tile, _round_up(hw, 128))
    m_pad = _round_up(hw, tile)
    n_tiles = m_pad // tile

    # ---------------- glue: fused im2col + pool-window gather (plain JAX) ------
    # Single pass of strided slices (no gather op): slab for pooling offset
    # (di,dj) and conv tap (kh,kw) is x_pad[:, :, di*stride+kh :: ps*stride, ...].
    xp = jnp.pad(x, ((0, 0), (0, 0), (padding, padding), (padding, padding)))
    rs = pool_stride * stride
    slabs = []
    for di in range(pool_size):
        for dj in range(pool_size):
            for kh in range(KH):
                for kw in range(KW):
                    r0 = di * stride + kh
                    c0 = dj * stride + kw
                    slabs.append(
                        xp[:, :, r0: r0 + (Hp - 1) * rs + 1: rs,
                                 c0: c0 + (Wp - 1) * rs + 1: rs])  # (N,Cin,Hp,Wp)
    # (pool_win*KH*KW, N, Cin, Hp, Wp) -> (N, pool_win, Cin, KH*KW, Hp, Wp)
    pat = jnp.stack(slabs, axis=0).reshape(pool_win, KH * KW, N, Cin, Hp, Wp)
    pat = pat.transpose(2, 0, 3, 1, 4, 5).reshape(N, pool_win, K, hw)
    # Fused bias: ones row at index K; pad K+1 -> k_pad, Hp*Wp -> m_pad; cast bf16.
    pat = jnp.concatenate(
        [pat, jnp.ones((N, pool_win, 1, hw), pat.dtype)], axis=2)
    pat = jnp.pad(pat, ((0, 0), (0, 0), (0, k_pad - (K + 1)), (0, m_pad - hw)))
    pat = pat.astype(compute_dtype)

    # Reorder conv weights/bias: PyTorch channel c = o*k_groups + g  ->  matrix
    # row g*cpad + o, so maxout is a max over contiguous 8-aligned row blocks.
    w_og = weight.reshape(Cout, k_groups, K)            # [o, g, :]
    w_g = jnp.transpose(w_og, (1, 0, 2))                # (k_groups, Cout, K)
    b_g = bias.reshape(Cout, k_groups).T[..., None]     # (k_groups, Cout, 1)
    wm = jnp.concatenate([w_g, b_g], axis=-1)           # (k_groups, Cout, K+1)
    wm = jnp.pad(wm, ((0, 0), (0, cpad - Cout), (0, k_pad - (K + 1))))
    wm = wm.reshape(ctot_pad, k_pad).astype(compute_dtype)

    # ---------------- Pallas kernel call ----------------
    kernel = functools.partial(_maxout_conv_kernel, k_groups=k_groups,
                               cpad=cpad, pool_win=pool_win)
    out_bytes = N * cpad * m_pad * 4
    cost = pl.CostEstimate(
        flops=2 * N * pool_win * ctot_pad * k_pad * m_pad,
        transcendentals=0,
        bytes_accessed=int(pat.nbytes) + int(wm.nbytes) + out_bytes)

    out_flat = pl.pallas_call(
        kernel,
        out_shape=jax.ShapeDtypeStruct((N, cpad, m_pad), jnp.float32),
        grid_spec=pltpu.PrefetchScalarGridSpec(
            num_scalar_prefetch=0,
            grid=(N, n_tiles),
            in_specs=[
                pl.BlockSpec((ctot_pad, k_pad), lambda n, t: (0, 0)),
                pl.BlockSpec((None, pool_win, k_pad, tile),
                             lambda n, t: (n, 0, 0, t)),
            ],
            out_specs=pl.BlockSpec((None, cpad, tile), lambda n, t: (n, 0, t)),
        ),
        compiler_params=pltpu.CompilerParams(
            dimension_semantics=("parallel", "parallel"),
            vmem_limit_bytes=32 * 1024 * 1024),
        cost_estimate=cost,
    )(wm, pat)

    # Output is already channel-major: drop padding, reshape (no big transpose).
    out = out_flat[:, :Cout, :hw].reshape(N, Cout, Hp, Wp)
    return out.astype(x.dtype)


def _reference(x, weight, bias, *, k_groups, padding, stride,
               pool_size, pool_stride):
    """Pure-JAX (f32) reference matching the PyTorch module."""
    conv = lax.conv_general_dilated(
        x, weight, window_strides=(stride, stride),
        padding=[(padding, padding), (padding, padding)],
        dimension_numbers=("NCHW", "OIHW", "NCHW"))
    conv = conv + bias[None, :, None, None]
    N, Ctot, Hc, Wc = conv.shape
    Cout = Ctot // k_groups
    y = conv.reshape(N, Cout, k_groups, Hc, Wc).max(axis=2)
    pooled = lax.reduce_window(
        y, -jnp.inf, lax.max,
        window_dimensions=(1, 1, pool_size, pool_size),
        window_strides=(1, 1, pool_stride, pool_stride),
        padding="VALID")
    return pooled


if __name__ == "__main__":
    # Module hyperparameters (small, consistent with the forward pass).
    in_channels, out_channels = 4, 4
    k_groups, kernel_size, padding, stride = 2, 3, 1, 1
    pool_size, pool_stride = 2, 2
    N, H, W = 2, 16, 16

    key = jax.random.PRNGKey(0)
    kx, kw, kb = jax.random.split(key, 3)
    x = jax.random.normal(kx, (N, in_channels, H, W), jnp.float32)

    Ctot = k_groups * out_channels
    fan_in = in_channels * kernel_size * kernel_size
    bound = 1.0 / (fan_in ** 0.5)
    weight = jax.random.uniform(
        kw, (Ctot, in_channels, kernel_size, kernel_size),
        jnp.float32, -bound, bound)
    bias = jax.random.uniform(kb, (Ctot,), jnp.float32, -bound, bound)

    out = maxout_conv2d(x, weight, bias, k_groups=k_groups,
                        kernel_size=kernel_size, padding=padding,
                        stride=stride, pool_size=pool_size,
                        pool_stride=pool_stride)
    out = jax.block_until_ready(out)

    ref = _reference(x, weight, bias, k_groups=k_groups, padding=padding,
                     stride=stride, pool_size=pool_size,
                     pool_stride=pool_stride)
    assert out.shape == ref.shape, (out.shape, ref.shape)
    # bf16 matmul operands (f32 accumulate) -> loose tolerance vs f32 reference.
    assert jnp.allclose(out, ref, atol=2e-2, rtol=2e-2), \
        float(jnp.max(jnp.abs(out - ref)))
    print("KERNEL_OK")
</pallas_src>

<mosaic_0001>
module attributes {stable_mosaic.version = 11 : i64} {
  func.func @_maxout_conv_kernel(%arg0: i32, %arg1: i32, %arg2: memref<16x48xbf16, #tpu.memory_space<vmem>>, %arg3: memref<1x4x48x128xbf16, #tpu.memory_space<vmem>>, %arg4: memref<1x8x128xf32, #tpu.memory_space<vmem>>) attributes {dimension_semantics = [#tpu.dimension_semantics<parallel>, #tpu.dimension_semantics<parallel>], iteration_bounds = array<i64: 2, 1>, scalar_prefetch = 0 : i64, scratch_operands = 0 : i64, tpu.core_type = #tpu.core_type<tc>, window_params = [{pipeline_mode = #tpu.pipeline_mode<synchronous>, transform_indices = @transform_0, window_bounds = array<i64: 16, 48>}, {transform_indices = @transform_1, window_bounds = array<i64: 1, 4, 48, 128>}, {transform_indices = @transform_2, window_bounds = array<i64: 1, 8, 128>}]} {
    %c0 = arith.constant 0 : index
    %c0_0 = arith.constant 0 : index
    %0 = vector.load %arg2[%c0, %c0_0] : memref<16x48xbf16, #tpu.memory_space<vmem>>, vector<16x48xbf16>
    %c0_1 = arith.constant 0 : index
    %c0_2 = arith.constant 0 : index
    %c0_3 = arith.constant 0 : index
    %c0_4 = arith.constant 0 : index
    %1 = vector.load %arg3[%c0_1, %c0_2, %c0_3, %c0_4] : memref<1x4x48x128xbf16, #tpu.memory_space<vmem>>, vector<1x1x48x128xbf16>
    %2 = vector.shape_cast %1 : vector<1x1x48x128xbf16> to vector<48x128xbf16>
    %cst = arith.constant dense<0.000000e+00> : vector<16x128xf32>
    %3 = tpu.matmul %0, %2, %cst {dimension_numbers = #tpu.dot_dimension_numbers<[1], [0], [0], [1], [0, 0, 1, 1], [], []>} : vector<16x48xbf16>, vector<48x128xbf16>, vector<16x128xf32> -> vector<16x128xf32>
    %4 = vector.extract_strided_slice %3 {offsets = [0, 0], sizes = [8, 128], strides = [1, 1]} : vector<16x128xf32> to vector<8x128xf32>
    %5 = vector.extract_strided_slice %3 {offsets = [8, 0], sizes = [8, 128], strides = [1, 1]} : vector<16x128xf32> to vector<8x128xf32>
    %6 = arith.maximumf %4, %5 : vector<8x128xf32>
    %c0_5 = arith.constant 0 : index
    %c0_6 = arith.constant 0 : index
    %7 = vector.load %arg2[%c0_5, %c0_6] : memref<16x48xbf16, #tpu.memory_space<vmem>>, vector<16x48xbf16>
    %c0_7 = arith.constant 0 : index
    %c1 = arith.constant 1 : index
    %c0_8 = arith.constant 0 : index
    %c0_9 = arith.constant 0 : index
    %8 = vector.load %arg3[%c0_7, %c1, %c0_8, %c0_9] : memref<1x4x48x128xbf16, #tpu.memory_space<vmem>>, vector<1x1x48x128xbf16>
    %9 = vector.shape_cast %8 : vector<1x1x48x128xbf16> to vector<48x128xbf16>
    %cst_10 = arith.constant dense<0.000000e+00> : vector<16x128xf32>
    %10 = tpu.matmul %7, %9, %cst_10 {dimension_numbers = #tpu.dot_dimension_numbers<[1], [0], [0], [1], [0, 0, 1, 1], [], []>} : vector<16x48xbf16>, vector<48x128xbf16>, vector<16x128xf32> -> vector<16x128xf32>
    %11 = vector.extract_strided_slice %10 {offsets = [0, 0], sizes = [8, 128], strides = [1, 1]} : vector<16x128xf32> to vector<8x128xf32>
    %12 = vector.extract_strided_slice %10 {offsets = [8, 0], sizes = [8, 128], strides = [1, 1]} : vector<16x128xf32> to vector<8x128xf32>
    %13 = arith.maximumf %11, %12 : vector<8x128xf32>
    %14 = arith.maximumf %6, %13 : vector<8x128xf32>
    %c0_11 = arith.constant 0 : index
    %c0_12 = arith.constant 0 : index
    %15 = vector.load %arg2[%c0_11, %c0_12] : memref<16x48xbf16, #tpu.memory_space<vmem>>, vector<16x48xbf16>
    %c0_13 = arith.constant 0 : index
    %c2 = arith.constant 2 : index
    %c0_14 = arith.constant 0 : index
    %c0_15 = arith.constant 0 : index
    %16 = vector.load %arg3[%c0_13, %c2, %c0_14, %c0_15] : memref<1x4x48x128xbf16, #tpu.memory_space<vmem>>, vector<1x1x48x128xbf16>
    %17 = vector.shape_cast %16 : vector<1x1x48x128xbf16> to vector<48x128xbf16>
    %cst_16 = arith.constant dense<0.000000e+00> : vector<16x128xf32>
    %18 = tpu.matmul %15, %17, %cst_16 {dimension_numbers = #tpu.dot_dimension_numbers<[1], [0], [0], [1], [0, 0, 1, 1], [], []>} : vector<16x48xbf16>, vector<48x128xbf16>, vector<16x128xf32> -> vector<16x128xf32>
    %19 = vector.extract_strided_slice %18 {offsets = [0, 0], sizes = [8, 128], strides = [1, 1]} : vector<16x128xf32> to vector<8x128xf32>
    %20 = vector.extract_strided_slice %18 {offsets = [8, 0], sizes = [8, 128], strides = [1, 1]} : vector<16x128xf32> to vector<8x128xf32>
    %21 = arith.maximumf %19, %20 : vector<8x128xf32>
    %22 = arith.maximumf %14, %21 : vector<8x128xf32>
    %c0_17 = arith.constant 0 : index
    %c0_18 = arith.constant 0 : index
    %23 = vector.load %arg2[%c0_17, %c0_18] : memref<16x48xbf16, #tpu.memory_space<vmem>>, vector<16x48xbf16>
    %c0_19 = arith.constant 0 : index
    %c3 = arith.constant 3 : index
    %c0_20 = arith.constant 0 : index
    %c0_21 = arith.constant 0 : index
    %24 = vector.load %arg3[%c0_19, %c3, %c0_20, %c0_21] : memref<1x4x48x128xbf16, #tpu.memory_space<vmem>>, vector<1x1x48x128xbf16>
    %25 = vector.shape_cast %24 : vector<1x1x48x128xbf16> to vector<48x128xbf16>
    %cst_22 = arith.constant dense<0.000000e+00> : vector<16x128xf32>
    %26 = tpu.matmul %23, %25, %cst_22 {dimension_numbers = #tpu.dot_dimension_numbers<[1], [0], [0], [1], [0, 0, 1, 1], [], []>} : vector<16x48xbf16>, vector<48x128xbf16>, vector<16x128xf32> -> vector<16x128xf32>
    %27 = vector.extract_strided_slice %26 {offsets = [0, 0], sizes = [8, 128], strides = [1, 1]} : vector<16x128xf32> to vector<8x128xf32>
    %28 = vector.extract_strided_slice %26 {offsets = [8, 0], sizes = [8, 128], strides = [1, 1]} : vector<16x128xf32> to vector<8x128xf32>
    %29 = arith.maximumf %27, %28 : vector<8x128xf32>
    %30 = arith.maximumf %22, %29 : vector<8x128xf32>
    %c0_23 = arith.constant 0 : index
    %c0_24 = arith.constant 0 : index
    %c0_25 = arith.constant 0 : index
    %31 = vector.load %arg4[%c0_23, %c0_24, %c0_25] : memref<1x8x128xf32, #tpu.memory_space<vmem>>, vector<1x8x128xf32>
    %32 = vector.shape_cast %31 : vector<1x8x128xf32> to vector<8x128xf32>
    %33 = vector.shape_cast %30 : vector<8x128xf32> to vector<1x8x128xf32>
    tpu.vector_store %arg4[%c0_23, %c0_24, %c0_25], %33 {strides = array<i32>} : memref<1x8x128xf32, #tpu.memory_space<vmem>>, vector<1x8x128xf32>,
    return
  }
  func.func @transform_0(%arg0: i32, %arg1: i32) -> (i32, i32) {
    %c0_i32 = arith.constant 0 : i32
    %c0_i32_0 = arith.constant 0 : i32
    %c0_i32_1 = arith.constant 0 : i32
    return %c0_i32, %c0_i32_0 : i32, i32
  }
  func.func @transform_1(%arg0: i32, %arg1: i32) -> (i32, i32, i32, i32) {
    %c0_i32 = arith.constant 0 : i32
    %c0_i32_0 = arith.constant 0 : i32
    %c0_i32_1 = arith.constant 0 : i32
    return %arg0, %c0_i32, %c0_i32_0, %arg1 : i32, i32, i32, i32
  }
  func.func @transform_2(%arg0: i32, %arg1: i32) -> (i32, i32, i32) {
    %c0_i32 = arith.constant 0 : i32
    %c0_i32_0 = arith.constant 0 : i32
    return %arg0, %c0_i32, %arg1 : i32, i32, i32
  }
}

</mosaic_0001>

<llo_original>
// kernel: tpu_custom_call.1
$region0: #{tpu_custom_call.1}
  #allocation0 [shape = 'u32[]', space=smem, size = 0x4, offset = 0x4, fixed_abs, tag = 'smem constant byte address 0x4 - core index']
  #allocation1 [shape = 'u32[144,128]{1,0:T(1,128)}', space=vmem, size = 0x12000, scoped, tag = 'internal scratch']
  %s0 = inlined_call_operand.hbm [shape: bf16[16,48], index: 0, kind: input, shape index: {}]
  %s1 = inlined_call_operand.hbm [shape: bf16[2,4,48,128], index: 1, kind: input, shape index: {}]
  %s2 = inlined_call_operand.hbm [shape: f32[2,8,128], index: 2, kind: output, shape index: {}]
  %s3 = sld [smem:[#allocation0]]
  $region49: #{tpu_custom_call.1} parent=0
    _
  %s5 = ssub.s32 1, %s3
  %s6 = scalar_select 0, %s5, %s3
  $region1: #{tpu_custom_call.1} parent=0
    #allocation2 [shape = 'u8[4096]{0}', space=vmem, size = 0x1000, scoped, tag = 'input window, operand 0, single buffered']
    #allocation3 [shape = 's32[2]{0}', space=sflag, size = 0x8, scoped, tag = 'scoped memory for tpu_custom_call.1']
    #allocation4 [shape = 's32[2]{0}', space=sflag, size = 0x8, scoped, tag = 'scoped memory for tpu_custom_call.1']
    #allocation5 [shape = 'u8[98304]{0}', space=vmem, size = 0x18000, scoped, tag = 'input window, operand 1']
    #allocation6 [shape = 's32[2]{0}', space=sflag, size = 0x8, scoped, tag = 'scoped memory for tpu_custom_call.1']
    #allocation7 [shape = 'u8[8192]{0}', space=vmem, size = 0x2000, scoped, tag = 'output window, operand 0']
    %7 = vsyncpa [#allocation3], 0
    %8 = vsyncpa [#allocation6], 0
    %s9 = scalar_lea.sflag [#allocation6], 1
    %10 = vsyncpa %s9, 0
    %11 = vsyncpa [#allocation4], 0
    %s12 = scalar_lea.sflag [#allocation4], 1
    %13 = vsyncpa %s12, 0
    loop: start=0, step=1, limit=4
    $region2: #{tpu_custom_call.1} parent=1 // loop_pre_header
      _
    $region3: #{tpu_custom_call.1} parent=1 // loop_header
      %s15 = sphi 0, %s19
      %p16 = scmp.ge.s32.totalorder %s15, 4
      %s22 = sphi 0, %s34
      %s23 = sphi 0, %s30
      %s24 = sphi 0, %s22
      %s25 = sphi 0, %s23
      %s26 = sphi 0, %s24
      %s27 = sphi 0, %s25
      %s35 = sphi 0, %s35
      %s37 = sphi 0, %s35
      %s38 = sphi 0, %s37
      %s52 = sphi 0, %s38
      %s60 = sphi 0, %s62
      %s63 = sphi 0, %s60
      %s64 = sphi 0, %s63
      %s80 = sphi 0, %s64
      %s88 = sphi 0, %s90
      %s91 = sphi 0, %s88
      %s92 = sphi 0, %s91
      %s108 = sphi 0, %s92
    $region4: #{tpu_custom_call.1} parent=1 // loop_header_branch
      %18 = sbr.rel (%p16) target = $region8
    $region5: #{tpu_custom_call.1} parent=1 // loop_body
      %s20 = ssub.s32 %s15, 1
      %s21 = ssub.s32 %s15, 2
      %s28 = sadd.s32 1, %s23
      %p29 = scmp.ge.s32.totalorder %s28, 1
      %s30 = scalar_select %p29, 0, %s28
      %s31 = sadd.s32 1, %s22
      %s32 = scalar_select %p29, %s31, %s22
      %p33 = scmp.ge.s32.totalorder %s32, 2
      %s34 = scalar_select %p33, 0, %s32
      %s36 = sadd.s32 %s35, 1
      %p39 = scmp.eq.s32.totalorder %s15, 1
      %p40 = scmp.ne.s32.totalorder %s35, %s37
      %p41 = scmp.eq.s32.totalorder %s15, 0
      %p42 = por %p40, %p41
      %p43 = scmp.ne.s32.totalorder %s35, %s37
      %p44 = scmp.eq.s32.totalorder %s20, 1
      %p45 = por %p43, %p44
      %p46 = scmp.ne.s32.totalorder %s37, %s38
      %p47 = scmp.eq.s32.totalorder %s20, 0
      %p48 = por %p46, %p47
      %p49 = scmp.ne.s32.totalorder %s37, %s38
      %p50 = scmp.eq.s32.totalorder %s21, 1
      %p51 = por %p49, %p50
      %p53 = scmp.ne.s32.totalorder %s38, %s52
      %p54 = scmp.eq.s32.totalorder %s21, 0
      %p55 = por %p53, %p54
      %s56 = ssub.s32 %s22, %s34
      %s57 = ssub.s32 %s23, %s30
      %s58 = sor.u32 %s56, %s57
      %p59 = scmp.eq.s32.totalorder %s58, 0
      %s61 = sadd.s32 %s60, 1
      %s62 = scalar_select %p59, %s60, %s61
      %p65 = pneg %p59
      %p66 = scmp.eq.s32.totalorder %s15, 1
      %p67 = por %p65, %p66
      %p68 = scmp.ne.s32.totalorder %s60, %s63
      %p69 = scmp.eq.s32.totalorder %s15, 0
      %p70 = por %p68, %p69
      %p71 = scmp.ne.s32.totalorder %s60, %s63
      %p72 = scmp.eq.s32.totalorder %s20, 1
      %p73 = por %p71, %p72
      %p74 = scmp.ne.s32.totalorder %s63, %s64
      %p75 = scmp.eq.s32.totalorder %s20, 0
      %p76 = por %p74, %p75
      %p77 = scmp.ne.s32.totalorder %s63, %s64
      %p78 = scmp.eq.s32.totalorder %s21, 1
      %p79 = por %p77, %p78
      %p81 = scmp.ne.s32.totalorder %s64, %s80
      %p82 = scmp.eq.s32.totalorder %s21, 0
      %p83 = por %p81, %p82
      %s84 = ssub.s32 %s22, %s34
      %s85 = ssub.s32 %s23, %s30
      %s86 = sor.u32 %s84, %s85
      %p87 = scmp.eq.s32.totalorder %s86, 0
      %s89 = sadd.s32 %s88, 1
      %s90 = scalar_select %p87, %s88, %s89
      %p93 = pneg %p87
      %p94 = scmp.eq.s32.totalorder %s15, 1
      %p95 = por %p93, %p94
      %p96 = scmp.ne.s32.totalorder %s88, %s91
      %p97 = scmp.eq.s32.totalorder %s15, 0
      %p98 = por %p96, %p97
      %p99 = scmp.ne.s32.totalorder %s88, %s91
      %p100 = scmp.eq.s32.totalorder %s20, 1
      %p101 = por %p99, %p100
      %p102 = scmp.ne.s32.totalorder %s91, %s92
      %p103 = scmp.eq.s32.totalorder %s20, 0
      %p104 = por %p102, %p103
      %p105 = scmp.ne.s32.totalorder %s91, %s92
      %p106 = scmp.eq.s32.totalorder %s21, 1
      %p107 = por %p105, %p106
      %p109 = scmp.ne.s32.totalorder %s92, %s108
      %p110 = scmp.eq.s32.totalorder %s21, 0
      %p111 = por %p109, %p110
      %p112 = scmp.le.s32.totalorder 1, %s15
      %p113 = scmp.lt.s32.totalorder %s15, 3
      %p114 = pnand %p112, %p113
      %p115 = pneg %p114
      // Predicated region
      $region9: #{tpu_custom_call.1} parent=5 // pred_check
        _
      $region10: #{tpu_custom_call.1} parent=5 // pred_check_branch
        %117 = sbr.rel (%p114) target = $region12
      $region11: #{tpu_custom_call.1} parent=5 // pred_region
        %s118 = ssub.s32 %s15, 1
        // Predicated region
        $region13: #{tpu_custom_call.1} parent=11 // pred_check
          %p119 = pneg %p48
        $region14: #{tpu_custom_call.1} parent=11 // pred_check_branch
          %121 = sbr.rel (%p119) target = $region16
        $region15: #{tpu_custom_call.1} parent=11 // pred_region
          %s123 = ssub.s32 128, 128
          %124 = vsyncadd [#allocation3], %s123
          %s125 = sshll.u32 [#allocation2], 4
          %s126 = int_to_ptr.vmem [resolvable:$true] %s125
          %131 = dma.hbm_to_vmem [thread:$0]  %s0, 128, %s126, [#allocation3], 64, 64, 4
        $region16: #{tpu_custom_call.1} parent=11 // pred_fallthru
          _
      $region12: #{tpu_custom_call.1} parent=5 // pred_fallthru
        _
      %p132 = scmp.lt.s32.totalorder %s15, 2
      // Predicated region
      $region17: #{tpu_custom_call.1} parent=5 // pred_check
        %p133 = pneg %p132
      $region18: #{tpu_custom_call.1} parent=5 // pred_check_branch
        %135 = sbr.rel (%p133) target = $region20
      $region19: #{tpu_custom_call.1} parent=5 // pred_region
        // Predicated region
        $region21: #{tpu_custom_call.1} parent=19 // pred_check
          %p136 = pneg %p70
        $region22: #{tpu_custom_call.1} parent=19 // pred_check_branch
          %138 = sbr.rel (%p136) target = $region24
        $region23: #{tpu_custom_call.1} parent=19 // pred_region
          %s139 = sand.u32 %s60, 1
          %s140 = scalar_lea.sflag [#allocation6], %s139
          %s141 = sand.u32 %s60, 1
          %s142 = smul.addr %s141, 96
          %s143 = scalar_lea.vmem [#allocation5], %s142
          %s145 = ssub.s32 1536, 1536
          %146 = vsyncadd %s140, %s145
          %s147 = smul.addr %s22, 24
          %s148 = sadd.s32 %s23, %s147
          %s149 = smul.addr %s148, 64
          %s150 = scalar_lea.hbm %s1, %s149
          %s151 = sshll.u32 %s143, 4
          %s152 = int_to_ptr.vmem [resolvable:$true] %s151
          %157 = dma.hbm_to_vmem [thread:$0]  %s150, 1536, %s152, %s140, 64, 64, 4
        $region24: #{tpu_custom_call.1} parent=19 // pred_fallthru
          _
      $region20: #{tpu_custom_call.1} parent=5 // pred_fallthru
        _
      %p158 = scmp.le.s32.totalorder 1, %s15
      %p159 = scmp.lt.s32.totalorder %s15, 3
      %p160 = pnand %p158, %p159
      %p161 = pneg %p160
      // Predicated region
      $region25: #{tpu_custom_call.1} parent=5 // pred_check
        _
      $region26: #{tpu_custom_call.1} parent=5 // pred_check_branch
        %163 = sbr.rel (%p160) target = $region28
      $region27: #{tpu_custom_call.1} parent=5 // pred_region
        %s164 = ssub.s32 %s15, 1
        // Predicated region
        $region29: #{tpu_custom_call.1} parent=27 // pred_check
          %p165 = pneg %p48
        $region30: #{tpu_custom_call.1} parent=27 // pred_check_branch
          %167 = sbr.rel (%p165) target = $region32
        $region31: #{tpu_custom_call.1} parent=27 // pred_region
          %168 = dma.done [#allocation3], 128
        $region32: #{tpu_custom_call.1} parent=27 // pred_fallthru
          _
        %s169 = sand.u32 %s63, 1
        %s170 = scalar_lea.sflag [#allocation6], %s169
        %s171 = sand.u32 %s63, 1
        %s172 = smul.addr %s171, 96
        %s173 = scalar_lea.vmem [#allocation5], %s172
        // Predicated region
        $region33: #{tpu_custom_call.1} parent=27 // pred_check
          %p174 = pneg %p76
        $region34: #{tpu_custom_call.1} parent=27 // pred_check_branch
          %176 = sbr.rel (%p174) target = $region36
        $region35: #{tpu_custom_call.1} parent=27 // pred_region
          %177 = dma.done %s170, 1536
        $region36: #{tpu_custom_call.1} parent=27 // pred_fallthru
          _
        %p178 = pneg %p48
        %p179 = pneg %p45
        %s180 = sand.u32 %s63, 1
        %s181 = scalar_lea.sflag [#allocation6], %s180
        %s182 = sand.u32 %s63, 1
        %s183 = smul.addr %s182, 96
        %s184 = scalar_lea.vmem [#allocation5], %s183
        %p185 = pneg %p76
        %p186 = pneg %p73
        %p187 = pneg %p104
        %p188 = pneg %p101
        %s189 = sand.u32 %s91, 1
        %s190 = scalar_lea.sflag [#allocation4], %s189
        %s191 = sand.u32 %s91, 1
        %s192 = smul.addr %s191, 8
        %s193 = scalar_lea.vmem [#allocation7], %s192
        %v195 = vld [vmem:[#allocation2] sm:$0xf]
        %v196 = vld [vmem:[#allocation2 + $0x4] sm:$0xf]
        %v197 = vld [vmem:[%s173] sm:$0xf]
        %v198 = vld [vmem:[%s173 + $0x4] sm:$0xf]
        %v199 = vld [vmem:[%s173 + $0x8] sm:$0xf]
        %v200 = vld [vmem:[%s173 + $0xc] sm:$0xf]
        %v201 = vld [vmem:[%s173 + $0x10] sm:$0xf]
        %v202 = vld [vmem:[%s173 + $0x14] sm:$0xf]
        %v205 = vunpack.c.l.b16 %v195
        %v206 = vunpack.c.l.b16 %v196
        %v207 = vpack.c.b16 %v206, %v205
        %v214 = vunpack.c.l.b16 %v197
        %v215 = vunpack.c.l.b16 %v198
        %v216 = vunpack.c.l.b16 %v199
        %v217 = vunpack.c.l.b16 %v200
        %v218 = vunpack.c.l.b16 %v201
        %v219 = vunpack.c.l.b16 %v202
        %v220 = vpack.c.b16 %v215, %v214
        %v221 = vpack.c.b16 %v217, %v216
        %v222 = vpack.c.b16 %v219, %v218
        %vm226 = vcmask 392192
        %v228 = vsel %vm226, %v207, 0
        %230 = vmatprep.subr.bf16.mxu0 0
        %231 = vmatpush1.bf16.msra.mxu0 0
        %232 = vmatprep.subr.bf16.mxu0 0
        %233 = vmatpush1.bf16.msra.mxu0 0
        %234 = vmatprep.subr.bf16.mxu0 0
        %235 = vmatpush1.bf16.msra.mxu0 0
        %236 = vmatprep.subr.bf16.mxu0 0
        %237 = vmatpush1.bf16.msra.mxu0 0
        %238 = vmatprep.subr.bf16.mxu0 0
        %239 = vmatpush1.bf16.msra.mxu0 0
        %240 = vmatprep.subr.bf16.mxu0 0
        %241 = vmatpush1.bf16.msra.mxu0 %v222
        %242 = vmatprep.subr.bf16.mxu0 0
        %243 = vmatpush1.bf16.msra.mxu0 %v221
        %244 = vmatprep.subr.bf16.mxu0 0
        %245 = vmatpush1.bf16.msra.mxu0 %v220
        %246 = vmatprep.subr.bf16.mxu0 0
        %247 = vmatpush2.bf16.msra.mxu0 0
        %248 = vmatprep.subr.bf16.mxu0 0
        %249 = vmatpush2.bf16.msra.mxu0 0
        %250 = vmatprep.subr.bf16.mxu0 0
        %251 = vmatpush2.bf16.msra.mxu0 0
        %252 = vmatprep.subr.bf16.mxu0 0
        %253 = vmatpush2.bf16.msra.mxu0 0
        %254 = vmatprep.subr.bf16.mxu0 0
        %255 = vmatpush2.bf16.msra.mxu0 0
        %256 = vmatprep.subr.bf16.mxu0 0
        %257 = vmatpush2.bf16.msra.mxu0 0
        %258 = vmatprep.subr.bf16.mxu0 0
        %259 = vmatpush2.bf16.msra.mxu0 0
        %260 = vmatprep.subr.bf16.mxu0 0
        %261 = vmatpush2.bf16.msra.mxu0 0
        %262 = vmatprep.mubr.bf16.mxu0 0
        %263 = vmatmul.mubr.bf16.gmra.mxu0 %v228
        %v264 = vpop.f32.mrf.mxu0
        %v265 = vadd.f32 0.0, %v264
        %v266 = vpop.f32.mrf.mxu0
        %v267 = vpop.f32.mrf.mxu0
        %v268 = vadd.f32 0.0, %v267
        %v269 = vpop.f32.mrf.mxu0
        %270 = vdwg.mxu0
        %v271 = vmax.f32 %v265, %v268
        %s272 = scalar_lea.vmem %s173, 24 [#allocation5]
        %v273 = vld [vmem:[%s272] sm:$0xf]
        %v274 = vld [vmem:[%s272 + $0x4] sm:$0xf]
        %v275 = vld [vmem:[%s272 + $0x8] sm:$0xf]
        %v276 = vld [vmem:[%s272 + $0xc] sm:$0xf]
        %v277 = vld [vmem:[%s272 + $0x10] sm:$0xf]
        %v278 = vld [vmem:[%s272 + $0x14] sm:$0xf]
        %v285 = vunpack.c.l.b16 %v273
        %v286 = vunpack.c.l.b16 %v274
        %v287 = vunpack.c.l.b16 %v275
        %v288 = vunpack.c.l.b16 %v276
        %v289 = vunpack.c.l.b16 %v277
        %v290 = vunpack.c.l.b16 %v278
        %v291 = vpack.c.b16 %v286, %v285
        %v292 = vpack.c.b16 %v288, %v287
        %v293 = vpack.c.b16 %v290, %v289
        %297 = vmatprep.subr.bf16.mxu0 0
        %298 = vmatpush1.bf16.msra.mxu0 0
        %299 = vmatprep.subr.bf16.mxu0 0
        %300 = vmatpush1.bf16.msra.mxu0 0
        %301 = vmatprep.subr.bf16.mxu0 0
        %302 = vmatpush1.bf16.msra.mxu0 0
        %303 = vmatprep.subr.bf16.mxu0 0
        %304 = vmatpush1.bf16.msra.mxu0 0
        %305 = vmatprep.subr.bf16.mxu0 0
        %306 = vmatpush1.bf16.msra.mxu0 0
        %307 = vmatprep.subr.bf16.mxu0 0
        %308 = vmatpush1.bf16.msra.mxu0 %v293
        %309 = vmatprep.subr.bf16.mxu0 0
        %310 = vmatpush1.bf16.msra.mxu0 %v292
        %311 = vmatprep.subr.bf16.mxu0 0
        %312 = vmatpush1.bf16.msra.mxu0 %v291
        %313 = vmatprep.subr.bf16.mxu0 0
        %314 = vmatpush2.bf16.msra.mxu0 0
        %315 = vmatprep.subr.bf16.mxu0 0
        %316 = vmatpush2.bf16.msra.mxu0 0
        %317 = vmatprep.subr.bf16.mxu0 0
        %318 = vmatpush2.bf16.msra.mxu0 0
        %319 = vmatprep.subr.bf16.mxu0 0
        %320 = vmatpush2.bf16.msra.mxu0 0
        %321 = vmatprep.subr.bf16.mxu0 0
        %322 = vmatpush2.bf16.msra.mxu0 0
        %323 = vmatprep.subr.bf16.mxu0 0
        %324 = vmatpush2.bf16.msra.mxu0 0
        %325 = vmatprep.subr.bf16.mxu0 0
        %326 = vmatpush2.bf16.msra.mxu0 0
        %327 = vmatprep.subr.bf16.mxu0 0
        %328 = vmatpush2.bf16.msra.mxu0 0
        %329 = vmatprep.mubr.bf16.mxu0 0
        %330 = vmatmul.mubr.bf16.gmra.mxu0 %v228
        %v331 = vpop.f32.mrf.mxu0
        %v332 = vadd.f32 0.0, %v331
        %v333 = vpop.f32.mrf.mxu0
        %v334 = vpop.f32.mrf.mxu0
        %v335 = vadd.f32 0.0, %v334
        %v336 = vpop.f32.mrf.mxu0
        %337 = vdwg.mxu0
        %v338 = vmax.f32 %v332, %v335
        %v339 = vmax.f32 %v271, %v338
        %s340 = scalar_lea.vmem %s173, 48 [#allocation5]
        %v341 = vld [vmem:[%s340] sm:$0xf]
        %v342 = vld [vmem:[%s340 + $0x4] sm:$0xf]
        %v343 = vld [vmem:[%s340 + $0x8] sm:$0xf]
        %v344 = vld [vmem:[%s340 + $0xc] sm:$0xf]
        %v345 = vld [vmem:[%s340 + $0x10] sm:$0xf]
        %v346 = vld [vmem:[%s340 + $0x14] sm:$0xf]
        %v353 = vunpack.c.l.b16 %v341
        %v354 = vunpack.c.l.b16 %v342
        %v355 = vunpack.c.l.b16 %v343
        %v356 = vunpack.c.l.b16 %v344
        %v357 = vunpack.c.l.b16 %v345
        %v358 = vunpack.c.l.b16 %v346
        %v359 = vpack.c.b16 %v354, %v353
        %v360 = vpack.c.b16 %v356, %v355
        %v361 = vpack.c.b16 %v358, %v357
        %365 = vmatprep.subr.bf16.mxu0 0
        %366 = vmatpush1.bf16.msra.mxu0 0
        %367 = vmatprep.subr.bf16.mxu0 0
        %368 = vmatpush1.bf16.msra.mxu0 0
        %369 = vmatprep.subr.bf16.mxu0 0
        %370 = vmatpush1.bf16.msra.mxu0 0
        %371 = vmatprep.subr.bf16.mxu0 0
        %372 = vmatpush1.bf16.msra.mxu0 0
        %373 = vmatprep.subr.bf16.mxu0 0
        %374 = vmatpush1.bf16.msra.mxu0 0
        %375 = vmatprep.subr.bf16.mxu0 0
        %376 = vmatpush1.bf16.msra.mxu0 %v361
        %377 = vmatprep.subr.bf16.mxu0 0
        %378 = vmatpush1.bf16.msra.mxu0 %v360
        %379 = vmatprep.subr.bf16.mxu0 0
        %380 = vmatpush1.bf16.msra.mxu0 %v359
        %381 = vmatprep.subr.bf16.mxu0 0
        %382 = vmatpush2.bf16.msra.mxu0 0
        %383 = vmatprep.subr.bf16.mxu0 0
        %384 = vmatpush2.bf16.msra.mxu0 0
        %385 = vmatprep.subr.bf16.mxu0 0
        %386 = vmatpush2.bf16.msra.mxu0 0
        %387 = vmatprep.subr.bf16.mxu0 0
        %388 = vmatpush2.bf16.msra.mxu0 0
        %389 = vmatprep.subr.bf16.mxu0 0
        %390 = vmatpush2.bf16.msra.mxu0 0
        %391 = vmatprep.subr.bf16.mxu0 0
        %392 = vmatpush2.bf16.msra.mxu0 0
        %393 = vmatprep.subr.bf16.mxu0 0
        %394 = vmatpush2.bf16.msra.mxu0 0
        %395 = vmatprep.subr.bf16.mxu0 0
        %396 = vmatpush2.bf16.msra.mxu0 0
        %397 = vmatprep.mubr.bf16.mxu0 0
        %398 = vmatmul.mubr.bf16.gmra.mxu0 %v228
        %v399 = vpop.f32.mrf.mxu0
        %v400 = vadd.f32 0.0, %v399
        %v401 = vpop.f32.mrf.mxu0
        %v402 = vpop.f32.mrf.mxu0
        %v403 = vadd.f32 0.0, %v402
        %v404 = vpop.f32.mrf.mxu0
        %405 = vdwg.mxu0
        %v406 = vmax.f32 %v400, %v403
        %v407 = vmax.f32 %v339, %v406
        %s408 = scalar_lea.vmem %s173, 72 [#allocation5]
        %v409 = vld [vmem:[%s408] sm:$0xf]
        %v410 = vld [vmem:[%s408 + $0x4] sm:$0xf]
        %v411 = vld [vmem:[%s408 + $0x8] sm:$0xf]
        %v412 = vld [vmem:[%s408 + $0xc] sm:$0xf]
        %v413 = vld [vmem:[%s408 + $0x10] sm:$0xf]
        %v414 = vld [vmem:[%s408 + $0x14] sm:$0xf]
        %v421 = vunpack.c.l.b16 %v409
        %v422 = vunpack.c.l.b16 %v410
        %v423 = vunpack.c.l.b16 %v411
        %v424 = vunpack.c.l.b16 %v412
        %v425 = vunpack.c.l.b16 %v413
        %v426 = vunpack.c.l.b16 %v414
        %v427 = vpack.c.b16 %v422, %v421
        %v428 = vpack.c.b16 %v424, %v423
        %v429 = vpack.c.b16 %v426, %v425
        %433 = vmatprep.subr.bf16.mxu0 0
        %434 = vmatpush1.bf16.msra.mxu0 0
        %435 = vmatprep.subr.bf16.mxu0 0
        %436 = vmatpush1.bf16.msra.mxu0 0
        %437 = vmatprep.subr.bf16.mxu0 0
        %438 = vmatpush1.bf16.msra.mxu0 0
        %439 = vmatprep.subr.bf16.mxu0 0
        %440 = vmatpush1.bf16.msra.mxu0 0
        %441 = vmatprep.subr.bf16.mxu0 0
        %442 = vmatpush1.bf16.msra.mxu0 0
        %443 = vmatprep.subr.bf16.mxu0 0
        %444 = vmatpush1.bf16.msra.mxu0 %v429
        %445 = vmatprep.subr.bf16.mxu0 0
        %446 = vmatpush1.bf16.msra.mxu0 %v428
        %447 = vmatprep.subr.bf16.mxu0 0
        %448 = vmatpush1.bf16.msra.mxu0 %v427
        %449 = vmatprep.subr.bf16.mxu0 0
        %450 = vmatpush2.bf16.msra.mxu0 0
        %451 = vmatprep.subr.bf16.mxu0 0
        %452 = vmatpush2.bf16.msra.mxu0 0
        %453 = vmatprep.subr.bf16.mxu0 0
        %454 = vmatpush2.bf16.msra.mxu0 0
        %455 = vmatprep.subr.bf16.mxu0 0
        %456 = vmatpush2.bf16.msra.mxu0 0
        %457 = vmatprep.subr.bf16.mxu0 0
        %458 = vmatpush2.bf16.msra.mxu0 0
        %459 = vmatprep.subr.bf16.mxu0 0
        %460 = vmatpush2.bf16.msra.mxu0 0
        %461 = vmatprep.subr.bf16.mxu0 0
        %462 = vmatpush2.bf16.msra.mxu0 0
        %463 = vmatprep.subr.bf16.mxu0 0
        %464 = vmatpush2.bf16.msra.mxu0 0
        %465 = vmatprep.mubr.bf16.mxu0 0
        %466 = vmatmul.mubr.bf16.gmra.mxu0 %v228
        %v467 = vpop.f32.mrf.mxu0
        %v468 = vadd.f32 0.0, %v467
        %v469 = vpop.f32.mrf.mxu0
        %v470 = vpop.f32.mrf.mxu0
        %v471 = vadd.f32 0.0, %v470
        %v472 = vpop.f32.mrf.mxu0
        %473 = vdwg.mxu0
        %v474 = vmax.f32 %v468, %v471
        %v475 = vmax.f32 %v407, %v474
        %476 = vst [vmem:[%s193] sm:$0xff] %v475
        %s477 = sand.u32 %s91, 1
        %s478 = scalar_lea.sflag [#allocation4], %s477
        %s479 = sand.u32 %s91, 1
        %s480 = smul.addr %s479, 8
        %s481 = scalar_lea.vmem [#allocation7], %s480
        // Predicated region
        $region37: #{tpu_custom_call.1} parent=27 // pred_check
          %p482 = pneg %p101
        $region38: #{tpu_custom_call.1} parent=27 // pred_check_branch
          %484 = sbr.rel (%p482) target = $region40
        $region39: #{tpu_custom_call.1} parent=27 // pred_region
          %s486 = ssub.s32 128, 128
          %487 = vsyncadd %s478, %s486
          %s488 = sadd.s32 %s25, %s24
          %s489 = smul.addr %s488, 128
          %s490 = scalar_lea.hbm %s2, %s489
          %s492 = sshll.u32 %s481, 4
          %s493 = int_to_ptr.vmem [resolvable:$true] %s492
          %495 = dma.vmem_to_hbm [thread:$0]  %s493, 128, %s490, %s478
        $region40: #{tpu_custom_call.1} parent=27 // pred_fallthru
          _
      $region28: #{tpu_custom_call.1} parent=5 // pred_fallthru
        _
      %p496 = scmp.le.s32.totalorder 2, %s15
      // Predicated region
      $region41: #{tpu_custom_call.1} parent=5 // pred_check
        %p497 = pneg %p496
      $region42: #{tpu_custom_call.1} parent=5 // pred_check_branch
        %499 = sbr.rel (%p497) target = $region44
      $region43: #{tpu_custom_call.1} parent=5 // pred_region
        %s500 = ssub.s32 %s15, 2
        // Predicated region
        $region45: #{tpu_custom_call.1} parent=43 // pred_check
          %p501 = pneg %p107
        $region46: #{tpu_custom_call.1} parent=43 // pred_check_branch
          %503 = sbr.rel (%p501) target = $region48
        $region47: #{tpu_custom_call.1} parent=43 // pred_region
          %s504 = sand.u32 %s92, 1
          %s505 = scalar_lea.sflag [#allocation4], %s504
          %s506 = sand.u32 %s92, 1
          %s507 = smul.addr %s506, 8
          %s508 = scalar_lea.vmem [#allocation7], %s507
          %509 = dma.done %s505, 128
        $region48: #{tpu_custom_call.1} parent=43 // pred_fallthru
          _
      $region44: #{tpu_custom_call.1} parent=5 // pred_fallthru
        _
    $region6: #{tpu_custom_call.1} parent=1 // loop_footer
      %s19 = sadd.s32 1, %s15
    $region7: #{tpu_custom_call.1} parent=1 // loop_footer_branch
      %14 = sbr.rel target = $region3
    $region8: #{tpu_custom_call.1} parent=1 // loop_exit
      _
    %510 = vsyncpa [#allocation3], 1
    %s511 = scalar_lea.sflag [#allocation3], 1
    %512 = vsyncpa %s511, 1
    %513 = vsyncpa [#allocation6], 1
    %s514 = scalar_lea.sflag [#allocation6], 1
    %515 = vsyncpa %s514, 1
    %516 = vsyncpa [#allocation4], 1
    %s517 = scalar_lea.sflag [#allocation4], 1
    %518 = vsyncpa %s517, 1

</llo_original>
